<compile_context>
chip_gen: v7x
topology: tpu7x:2x2x1
jax: 0.10.0
libtpu: 0.0.40
codegen_flags: <defaults>
</compile_context>

<pallas_src>
import jax
import jax.numpy as jnp
from jax.experimental import pallas as pl
from jax.experimental.pallas import tpu as pltpu

_MIB = 1024 * 1024


def _pick_tile(dim, preferred, align):
    """Largest tile <= preferred that is `align`-aligned and divides `dim`.

    Falls back to the full extent (always a legal block shape) when no aligned
    divisor exists, so arbitrary shapes run instead of asserting.
    """
    if dim <= preferred:
        return dim
    t = (preferred // align) * align
    while t >= align:
        if dim % t == 0:
            return t
        t -= align
    return dim


def _make_kernel(x_full_k: bool, tk: int, cast_bf16: bool, precision):
    """Build the matmul+z kernel for one (tm, tn) output tile."""

    def kernel(z_ref, x_ref, y_ref, o_ref):
        k = pl.program_id(2)

        @pl.when(k == 0)
        def _init():
            # Fold the data-dependent scalar z into the accumulator init so no
            # separate "+ z" epilogue pass is needed.
            o_ref[...] = jnp.full(
                o_ref.shape, z_ref[0].astype(o_ref.dtype), o_ref.dtype
            )

        if x_full_k:
            # x block is a resident (tm, K) strip; slice the current K-chunk.
            start = pl.multiple_of(k * tk, tk)
            x_blk = x_ref[:, pl.ds(start, tk)]
        else:
            x_blk = x_ref[...]
        y_blk = y_ref[...]

        if cast_bf16:
            # Optional: bf16 operands, f32 accumulation (2-3x MXU throughput on
            # v6e/v7x). Deviates slightly from PyTorch f32 matmul numerics.
            x_blk = x_blk.astype(jnp.bfloat16)
            y_blk = y_blk.astype(jnp.bfloat16)

        o_ref[...] += jnp.dot(
            x_blk,
            y_blk,
            preferred_element_type=jnp.float32,
            precision=precision,
        )

    return kernel


def compute(
    x,
    y,
    *,
    tm=512,
    tn=512,
    tk=1024,
    cast_operands_to_bf16=False,
    precision=None,
):
    """Pallas equivalent of Compute.forward(x, y)."""
    M, K = x.shape
    K2, N = y.shape
    assert K == K2, "inner dimensions must match"

    # --- Tile selection (8/128 alignment or full extent; always divides). ---
    tm = _pick_tile(M, tm, 8)     # sublane dim of x / out
    tn = _pick_tile(N, tn, 128)   # lane dim of y / out
    tk = _pick_tile(K, tk, 128)   # lane dim of x, sublane dim of y

    # v7x megacore: make sure there are >= 2 parallel output tiles whenever the
    # problem allows it, so both TensorCores get work. Prefer splitting tn
    # (keeps output stores lane-dense at >= 128), then tm.
    while (M // tm) * (N // tn) < 2:
        if tn >= 256 and (tn // 2) % 128 == 0 and N % (tn // 2) == 0:
            tn //= 2
        elif tm >= 16 and (tm // 2) % 8 == 0 and M % (tm // 2) == 0:
            tm //= 2
        else:
            break

    # x-strip residency: keep the full-K strip of x in VMEM (constant block
    # index across j and k -> DMA'd from HBM once per i instead of once per
    # (i, j)). Only when it fits a conservative VMEM budget.
    x_full_k = (K > tk) and (2 * tm * K * 4 <= 24 * _MIB)

    grid = (M // tm, N // tn, K // tk)

    if x_full_k:
        x_spec = pl.BlockSpec((tm, K), lambda i, j, k, z_ref: (i, 0))
    else:
        x_spec = pl.BlockSpec((tm, tk), lambda i, j, k, z_ref: (i, k))
    y_spec = pl.BlockSpec((tk, tn), lambda i, j, k, z_ref: (k, j))
    # Output block index is constant in k -> resident accumulator tile.
    o_spec = pl.BlockSpec((tm, tn), lambda i, j, k, z_ref: (i, j))

    # Explicit VMEM budget: double-buffered tiles + ~30% headroom, >= 32 MiB,
    # capped at 56 MiB (>= 20% headroom on v7x's 64 MiB physical VMEM).
    est = (2 * tm * (K if x_full_k else tk) + 2 * tk * tn + 2 * tm * tn) * 4
    vmem_limit = int(min(max(est * 1.3, 32 * _MIB), 56 * _MIB))

    # Data-dependent scalar, computed once in the wrapper (negligible cost) and
    # prefetched into SMEM.  Uses the *original* f32 value for the == 42 test.
    z = jnp.where(x[0, 0] == 42.0, 5, 10).astype(jnp.int32).reshape((1,))

    kernel = _make_kernel(x_full_k, tk, cast_operands_to_bf16, precision)

    return pl.pallas_call(
        kernel,
        out_shape=jax.ShapeDtypeStruct((M, N), jnp.float32),
        grid_spec=pltpu.PrefetchScalarGridSpec(
            num_scalar_prefetch=1,
            grid=grid,
            in_specs=[x_spec, y_spec],
            out_specs=o_spec,
        ),
        compiler_params=pltpu.CompilerParams(
            dimension_semantics=("parallel", "parallel", "arbitrary"),
            vmem_limit_bytes=vmem_limit,
        ),
    )(z, x, y)


if __name__ == "__main__":
    key = jax.random.PRNGKey(0)
    kx, ky = jax.random.split(key)

    # Small shapes, but large enough to exercise a multi-step K reduction, the
    # x-strip residency path (K > tk) and the >=2-parallel-tile adjustment.
    M, K, N = 16, 2048, 256
    x = jax.random.normal(kx, (M, K), dtype=jnp.float32)
    y = jax.random.normal(ky, (K, N), dtype=jnp.float32)

    # Case 1: x[0,0] != 42  ->  z = 10
    out1 = jax.block_until_ready(compute(x, y))
    ref1 = jnp.dot(x, y, preferred_element_type=jnp.float32) + 10.0

    # Case 2: force x[0,0] == 42  ->  z = 5
    x42 = x.at[0, 0].set(42.0)
    out2 = jax.block_until_ready(compute(x42, y))
    ref2 = jnp.dot(x42, y, preferred_element_type=jnp.float32) + 5.0

    assert out1.shape == (M, N) and out1.dtype == jnp.float32
    # Tolerance accounts for possible multi-pass bf16 lowering of f32 matmul at
    # default MXU precision vs. the XLA reference (pass precision=HIGHEST to
    # compute() if tighter parity with PyTorch f32 is required).
    assert jnp.allclose(out1, ref1, atol=2e-2, rtol=2e-2)
    assert jnp.allclose(out2, ref2, atol=2e-2, rtol=2e-2)

    print("KERNEL_OK")
</pallas_src>

<mosaic_0001>
module attributes {stable_mosaic.version = 11 : i64} {
  func.func @kernel(%arg0: i32, %arg1: i32, %arg2: i32, %arg3: memref<1xi32, #tpu.memory_space<smem>>, %arg4: memref<16x2048xf32, #tpu.memory_space<vmem>>, %arg5: memref<1024x128xf32, #tpu.memory_space<vmem>>, %arg6: memref<16x128xf32, #tpu.memory_space<vmem>>) attributes {dimension_semantics = [#tpu.dimension_semantics<parallel>, #tpu.dimension_semantics<parallel>, #tpu.dimension_semantics<arbitrary>], iteration_bounds = array<i64: 1, 2, 2>, scalar_prefetch = 1 : i64, scratch_operands = 0 : i64, tpu.core_type = #tpu.core_type<tc>, window_params = [{transform_indices = @transform_0, window_bounds = array<i64: 16, 2048>}, {transform_indices = @transform_1, window_bounds = array<i64: 1024, 128>}, {transform_indices = @transform_2, window_bounds = array<i64: 16, 128>}]} {
    %c0_i32 = arith.constant 0 : i32
    %0 = arith.cmpi eq, %arg2, %c0_i32 : i32
    %1 = arith.extui %0 : i1 to i32
    %c0_i32_0 = arith.constant 0 : i32
    %2 = arith.cmpi ne, %1, %c0_i32_0 : i32
    scf.if %2 {
      %c0_7 = arith.constant 0 : index
      %12 = memref.load %arg3[%c0_7] : memref<1xi32, #tpu.memory_space<smem>>
      %13 = arith.sitofp %12 : i32 to f32
      %14 = vector.broadcast %13 : f32 to vector<16x128xf32>
      %c0_8 = arith.constant 0 : index
      %c0_9 = arith.constant 0 : index
      %15 = vector.load %arg6[%c0_8, %c0_9] : memref<16x128xf32, #tpu.memory_space<vmem>>, vector<16x128xf32>
      tpu.vector_store %arg6[%c0_8, %c0_9], %14 {strides = array<i32>} : memref<16x128xf32, #tpu.memory_space<vmem>>, vector<16x128xf32>,
    } else {
    }
    %c1024_i32 = arith.constant 1024 : i32
    %3 = arith.muli %arg2, %c1024_i32 : i32
    %4 = tpu.assume_multiple %3, 1024 : i32
    %c0 = arith.constant 0 : index
    %5 = arith.index_cast %4 : i32 to index
    %6 = vector.load %arg4[%c0, %5] : memref<16x2048xf32, #tpu.memory_space<vmem>>, vector<16x1024xf32>
    %c0_1 = arith.constant 0 : index
    %c0_2 = arith.constant 0 : index
    %7 = vector.load %arg5[%c0_1, %c0_2] : memref<1024x128xf32, #tpu.memory_space<vmem>>, vector<1024x128xf32>
    %c0_3 = arith.constant 0 : index
    %c0_4 = arith.constant 0 : index
    %8 = vector.load %arg6[%c0_3, %c0_4] : memref<16x128xf32, #tpu.memory_space<vmem>>, vector<16x128xf32>
    %cst = arith.constant dense<0.000000e+00> : vector<16x128xf32>
    %9 = tpu.matmul %6, %7, %cst {dimension_numbers = #tpu.dot_dimension_numbers<[1], [0], [0], [1], [0, 0, 1, 1], [], []>} : vector<16x1024xf32>, vector<1024x128xf32>, vector<16x128xf32> -> vector<16x128xf32>
    %10 = arith.addf %8, %9 : vector<16x128xf32>
    %c0_5 = arith.constant 0 : index
    %c0_6 = arith.constant 0 : index
    %11 = vector.load %arg6[%c0_5, %c0_6] : memref<16x128xf32, #tpu.memory_space<vmem>>, vector<16x128xf32>
    tpu.vector_store %arg6[%c0_5, %c0_6], %10 {strides = array<i32>} : memref<16x128xf32, #tpu.memory_space<vmem>>, vector<16x128xf32>,
    return
  }
  func.func @transform_0(%arg0: i32, %arg1: i32, %arg2: i32, %arg3: memref<1xi32, #tpu.memory_space<smem>>) -> (i32, i32) {
    %c0_i32 = arith.constant 0 : i32
    %c0_i32_0 = arith.constant 0 : i32
    return %arg0, %c0_i32 : i32, i32
  }
  func.func @transform_1(%arg0: i32, %arg1: i32, %arg2: i32, %arg3: memref<1xi32, #tpu.memory_space<smem>>) -> (i32, i32) {
    %c0_i32 = arith.constant 0 : i32
    return %arg2, %arg1 : i32, i32
  }
  func.func @transform_2(%arg0: i32, %arg1: i32, %arg2: i32, %arg3: memref<1xi32, #tpu.memory_space<smem>>) -> (i32, i32) {
    %c0_i32 = arith.constant 0 : i32
    return %arg0, %arg1 : i32, i32
  }
}

</mosaic_0001>

<llo_original>
// kernel: tpu_custom_call.1
$region0: #{tpu_custom_call.1}
  #allocation0 [shape = 'u32[]', space=smem, size = 0x4, offset = 0x4, fixed_abs, tag = 'smem constant byte address 0x4 - core index']
  #allocation1 [shape = 'u32[144,128]{1,0:T(1,128)}', space=vmem, size = 0x12000, scoped, tag = 'internal scratch']
  #allocation2 [shape = 's32[1]{0}', space=sflag, size = 0x4, scoped, tag = 'scoped memory for tpu_custom_call.1']
  #allocation3 [shape = 's32[1]{0:T(128)S(6)}', space=smem, size = 0x200, scoped, tag = 'prefetched SMEM operand 0']
  %s0 = inlined_call_operand.<no memory space> [shape: s32[1], index: 0, kind: input, shape index: {}]
  %s1 = inlined_call_operand.hbm [shape: f32[16,2048], index: 1, kind: input, shape index: {}]
  %s2 = inlined_call_operand.hbm [shape: f32[2048,256], index: 2, kind: input, shape index: {}]
  %s3 = inlined_call_operand.hbm [shape: f32[16,256], index: 3, kind: output, shape index: {}]
  %s4 = sld [smem:[#allocation0]]
  $region53: #{tpu_custom_call.1} parent=0
    _
  %s6 = ssub.s32 1, %s4
  %s7 = scalar_select 0, %s6, %s4
  %8 = sst [smem:[#allocation3]] %s0
  $region1: #{tpu_custom_call.1} parent=0
    #allocation4 [shape = 'u8[131072]{0}', space=vmem, size = 0x20000, scoped, tag = 'input window, operand 1, single buffered']
    #allocation5 [shape = 's32[2]{0}', space=sflag, size = 0x8, scoped, tag = 'scoped memory for tpu_custom_call.1']
    #allocation6 [shape = 's32[2]{0}', space=sflag, size = 0x8, scoped, tag = 'scoped memory for tpu_custom_call.1']
    #allocation7 [shape = 'u8[1048576]{0}', space=vmem, size = 0x100000, scoped, tag = 'input window, operand 2']
    #allocation8 [shape = 's32[2]{0}', space=sflag, size = 0x8, scoped, tag = 'scoped memory for tpu_custom_call.1']
    #allocation9 [shape = 'u8[16384]{0}', space=vmem, size = 0x4000, scoped, tag = 'output window, operand 0']
    %9 = vsyncpa [#allocation5], 0
    %10 = vsyncpa [#allocation8], 0
    %s11 = scalar_lea.sflag [#allocation8], 1
    %12 = vsyncpa %s11, 0
    %13 = vsyncpa [#allocation6], 0
    %s14 = scalar_lea.sflag [#allocation6], 1
    %15 = vsyncpa %s14, 0
    loop: start=0, step=1, limit=6
    $region2: #{tpu_custom_call.1} parent=1 // loop_pre_header
      _
    $region3: #{tpu_custom_call.1} parent=1 // loop_header
      %s17 = sphi 0, %s21
      %p18 = scmp.ge.s32.totalorder %s17, 6
      %s24 = sphi 0, %s43
      %s25 = sphi 0, %s39
      %s26 = sphi 0, %s35
      %s27 = sphi 0, %s24
      %s28 = sphi 0, %s25
      %s29 = sphi 0, %s26
      %s30 = sphi 0, %s27
      %s31 = sphi 0, %s28
      %s32 = sphi 0, %s29
      %s46 = sphi 0, %s48
      %s49 = sphi 0, %s46
      %s50 = sphi 0, %s49
      %s66 = sphi 0, %s50
      %s74 = sphi 0, %s76
      %s77 = sphi 0, %s74
      %s78 = sphi 0, %s77
      %s94 = sphi 0, %s78
      %s102 = sphi 0, %s104
      %s105 = sphi 0, %s102
      %s106 = sphi 0, %s105
      %s122 = sphi 0, %s106
    $region4: #{tpu_custom_call.1} parent=1 // loop_header_branch
      %20 = sbr.rel (%p18) target = $region8
    $region5: #{tpu_custom_call.1} parent=1 // loop_body
      %s22 = ssub.s32 %s17, 1
      %s23 = ssub.s32 %s17, 2
      %s33 = sadd.s32 1, %s26
      %p34 = scmp.ge.s32.totalorder %s33, 2
      %s35 = scalar_select %p34, 0, %s33
      %s36 = sadd.s32 1, %s25
      %s37 = scalar_select %p34, %s36, %s25
      %p38 = scmp.ge.s32.totalorder %s37, 2
      %s39 = scalar_select %p38, 0, %s37
      %s40 = sadd.s32 1, %s24
      %s41 = scalar_select %p38, %s40, %s24
      %p42 = scmp.ge.s32.totalorder %s41, 1
      %s43 = scalar_select %p42, 0, %s41
      %s44 = ssub.s32 %s24, %s43
      %p45 = scmp.eq.s32.totalorder %s44, 0
      %s47 = sadd.s32 %s46, 1
      %s48 = scalar_select %p45, %s46, %s47
      %p51 = pneg %p45
      %p52 = scmp.eq.s32.totalorder %s17, 3
      %p53 = por %p51, %p52
      %p54 = scmp.ne.s32.totalorder %s46, %s49
      %p55 = scmp.eq.s32.totalorder %s17, 0
      %p56 = por %p54, %p55
      %p57 = scmp.ne.s32.totalorder %s46, %s49
      %p58 = scmp.eq.s32.totalorder %s22, 3
      %p59 = por %p57, %p58
      %p60 = scmp.ne.s32.totalorder %s49, %s50
      %p61 = scmp.eq.s32.totalorder %s22, 0
      %p62 = por %p60, %p61
      %p63 = scmp.ne.s32.totalorder %s49, %s50
      %p64 = scmp.eq.s32.totalorder %s23, 3
      %p65 = por %p63, %p64
      %p67 = scmp.ne.s32.totalorder %s50, %s66
      %p68 = scmp.eq.s32.totalorder %s23, 0
      %p69 = por %p67, %p68
      %s70 = ssub.s32 %s26, %s35
      %s71 = ssub.s32 %s25, %s39
      %s72 = sor.u32 %s70, %s71
      %p73 = scmp.eq.s32.totalorder %s72, 0
      %s75 = sadd.s32 %s74, 1
      %s76 = scalar_select %p73, %s74, %s75
      %p79 = pneg %p73
      %p80 = scmp.eq.s32.totalorder %s17, 3
      %p81 = por %p79, %p80
      %p82 = scmp.ne.s32.totalorder %s74, %s77
      %p83 = scmp.eq.s32.totalorder %s17, 0
      %p84 = por %p82, %p83
      %p85 = scmp.ne.s32.totalorder %s74, %s77
      %p86 = scmp.eq.s32.totalorder %s22, 3
      %p87 = por %p85, %p86
      %p88 = scmp.ne.s32.totalorder %s77, %s78
      %p89 = scmp.eq.s32.totalorder %s22, 0
      %p90 = por %p88, %p89
      %p91 = scmp.ne.s32.totalorder %s77, %s78
      %p92 = scmp.eq.s32.totalorder %s23, 3
      %p93 = por %p91, %p92
      %p95 = scmp.ne.s32.totalorder %s78, %s94
      %p96 = scmp.eq.s32.totalorder %s23, 0
      %p97 = por %p95, %p96
      %s98 = ssub.s32 %s24, %s43
      %s99 = ssub.s32 %s25, %s39
      %s100 = sor.u32 %s98, %s99
      %p101 = scmp.eq.s32.totalorder %s100, 0
      %s103 = sadd.s32 %s102, 1
      %s104 = scalar_select %p101, %s102, %s103
      %p107 = pneg %p101
      %p108 = scmp.eq.s32.totalorder %s17, 3
      %p109 = por %p107, %p108
      %p110 = scmp.ne.s32.totalorder %s102, %s105
      %p111 = scmp.eq.s32.totalorder %s17, 0
      %p112 = por %p110, %p111
      %p113 = scmp.ne.s32.totalorder %s102, %s105
      %p114 = scmp.eq.s32.totalorder %s22, 3
      %p115 = por %p113, %p114
      %p116 = scmp.ne.s32.totalorder %s105, %s106
      %p117 = scmp.eq.s32.totalorder %s22, 0
      %p118 = por %p116, %p117
      %p119 = scmp.ne.s32.totalorder %s105, %s106
      %p120 = scmp.eq.s32.totalorder %s23, 3
      %p121 = por %p119, %p120
      %p123 = scmp.ne.s32.totalorder %s106, %s122
      %p124 = scmp.eq.s32.totalorder %s23, 0
      %p125 = por %p123, %p124
      %p126 = scmp.le.s32.totalorder 1, %s17
      %p127 = scmp.lt.s32.totalorder %s17, 5
      %p128 = pnand %p126, %p127
      %p129 = pneg %p128
      // Predicated region
      $region9: #{tpu_custom_call.1} parent=5 // pred_check
        _
      $region10: #{tpu_custom_call.1} parent=5 // pred_check_branch
        %131 = sbr.rel (%p128) target = $region12
      $region11: #{tpu_custom_call.1} parent=5 // pred_region
        %s132 = ssub.s32 %s17, 1
        // Predicated region
        $region13: #{tpu_custom_call.1} parent=11 // pred_check
          %p133 = pneg %p62
        $region14: #{tpu_custom_call.1} parent=11 // pred_check_branch
          %135 = sbr.rel (%p133) target = $region16
        $region15: #{tpu_custom_call.1} parent=11 // pred_region
          %s136 = smul.u32 2, %s27
          %s138 = ssub.s32 4096, 4096
          %139 = vsyncadd [#allocation5], %s138
          %s140 = smul.addr %s136, 16
          %s141 = smul.addr %s140, 128
          %s142 = scalar_lea.hbm %s1, %s141
          %s143 = sshll.u32 [#allocation4], 4
          %s144 = int_to_ptr.vmem [resolvable:$true] %s143
          %149 = dma.hbm_to_vmem [thread:$0]  %s142, 4096, %s144, [#allocation5], 2048, 2048, 128
        $region16: #{tpu_custom_call.1} parent=11 // pred_fallthru
          _
      $region12: #{tpu_custom_call.1} parent=5 // pred_fallthru
        _
      %p150 = scmp.lt.s32.totalorder %s17, 4
      // Predicated region
      $region17: #{tpu_custom_call.1} parent=5 // pred_check
        %p151 = pneg %p150
      $region18: #{tpu_custom_call.1} parent=5 // pred_check_branch
        %153 = sbr.rel (%p151) target = $region20
      $region19: #{tpu_custom_call.1} parent=5 // pred_region
        // Predicated region
        $region21: #{tpu_custom_call.1} parent=19 // pred_check
          %p154 = pneg %p84
        $region22: #{tpu_custom_call.1} parent=19 // pred_check_branch
          %156 = sbr.rel (%p154) target = $region24
        $region23: #{tpu_custom_call.1} parent=19 // pred_region
          %s157 = sand.u32 %s74, 1
          %s158 = scalar_lea.sflag [#allocation8], %s157
          %s159 = sand.u32 %s74, 1
          %s160 = smul.addr %s159, 1024
          %s161 = scalar_lea.vmem [#allocation7], %s160
          %s162 = smul.u32 128, %s26
          %s164 = ssub.s32 16384, 16384
          %165 = vsyncadd %s158, %s164
          %s166 = smul.addr %s162, 2
          %s167 = sadd.s32 %s25, %s166
          %s168 = smul.addr %s167, 128
          %s169 = scalar_lea.hbm %s2, %s168
          %s170 = sshll.u32 %s161, 4
          %s171 = int_to_ptr.vmem [resolvable:$true] %s170
          %176 = dma.hbm_to_vmem [thread:$0]  %s169, 16384, %s171, %s158, 256, 128, 8
        $region24: #{tpu_custom_call.1} parent=19 // pred_fallthru
          _
      $region20: #{tpu_custom_call.1} parent=5 // pred_fallthru
        _
      %p177 = scmp.le.s32.totalorder 1, %s17
      %p178 = scmp.lt.s32.totalorder %s17, 5
      %p179 = pnand %p177, %p178
      %p180 = pneg %p179
      // Predicated region
      $region25: #{tpu_custom_call.1} parent=5 // pred_check
        _
      $region26: #{tpu_custom_call.1} parent=5 // pred_check_branch
        %182 = sbr.rel (%p179) target = $region28
      $region27: #{tpu_custom_call.1} parent=5 // pred_region
        %s183 = ssub.s32 %s17, 1
        // Predicated region
        $region29: #{tpu_custom_call.1} parent=27 // pred_check
          %p184 = pneg %p62
        $region30: #{tpu_custom_call.1} parent=27 // pred_check_branch
          %186 = sbr.rel (%p184) target = $region32
        $region31: #{tpu_custom_call.1} parent=27 // pred_region
          %187 = dma.done [#allocation5], 4096
        $region32: #{tpu_custom_call.1} parent=27 // pred_fallthru
          _
        %s188 = sand.u32 %s77, 1
        %s189 = scalar_lea.sflag [#allocation8], %s188
        %s190 = sand.u32 %s77, 1
        %s191 = smul.addr %s190, 1024
        %s192 = scalar_lea.vmem [#allocation7], %s191
        // Predicated region
        $region33: #{tpu_custom_call.1} parent=27 // pred_check
          %p193 = pneg %p90
        $region34: #{tpu_custom_call.1} parent=27 // pred_check_branch
          %195 = sbr.rel (%p193) target = $region36
        $region35: #{tpu_custom_call.1} parent=27 // pred_region
          %196 = dma.done %s189, 16384
        $region36: #{tpu_custom_call.1} parent=27 // pred_fallthru
          _
        %p197 = pneg %p62
        %p198 = pneg %p59
        %s199 = sand.u32 %s77, 1
        %s200 = scalar_lea.sflag [#allocation8], %s199
        %s201 = sand.u32 %s77, 1
        %s202 = smul.addr %s201, 1024
        %s203 = scalar_lea.vmem [#allocation7], %s202
        %p204 = pneg %p90
        %p205 = pneg %p87
        %p206 = pneg %p118
        %p207 = pneg %p115
        %s208 = sand.u32 %s105, 1
        %s209 = scalar_lea.sflag [#allocation6], %s208
        %s210 = sand.u32 %s105, 1
        %s211 = smul.addr %s210, 16
        %s212 = scalar_lea.vmem [#allocation9], %s211
        %s213 = smul.u32 2, %s27
        %s214 = smul.u32 128, %s29
        %s215 = smul.u32 2, %s27
        %p216 = scmp.eq.s32.totalorder %s29, 0
        // Predicated region
        $region37: #{tpu_custom_call.1} parent=27 // pred_check
          %p217 = pneg %p216
        $region38: #{tpu_custom_call.1} parent=27 // pred_check_branch
          %219 = sbr.rel (%p217) target = $region40
        $region39: #{tpu_custom_call.1} parent=27 // pred_region
          %s220 = sld [smem:[#allocation3]]
          %s221 = scvt.s32.f32 %s220
          %v222 = vstv %s221
          %223 = vst [vmem:[%s212] sm:$0xff] %v222
          %224 = vst [vmem:[%s212 + $0x8] sm:$0xff] %v222
        $region40: #{tpu_custom_call.1} parent=27 // pred_fallthru
          _
        %s225 = smul.u32 %s29, 1024
        %s226 = sshra.s32 %s225, 7
        %s227 = sand.u32 %s225, 127
        %s228 = smul.addr %s226, 8
        %s229 = scalar_lea.vmem [#allocation4], %s228
        %v230 = vld [vmem:[%s229] sm:$0xff]
        %v231 = vld [vmem:[%s229 + $0x8] sm:$0xff]
        %v232 = vld [vmem:[%s229 + $0x10] sm:$0xff]
        %v233 = vld [vmem:[%s229 + $0x18] sm:$0xff]
        %v234 = vld [vmem:[%s229 + $0x20] sm:$0xff]
        %v235 = vld [vmem:[%s229 + $0x28] sm:$0xff]
        %v236 = vld [vmem:[%s229 + $0x30] sm:$0xff]
        %v237 = vld [vmem:[%s229 + $0x38] sm:$0xff]
        %v238 = vld [vmem:[%s229 + $0x80] sm:$0xff]
        %v239 = vld [vmem:[%s229 + $0x88] sm:$0xff]
        %v240 = vld [vmem:[%s229 + $0x90] sm:$0xff]
        %v241 = vld [vmem:[%s229 + $0x98] sm:$0xff]
        %v242 = vld [vmem:[%s229 + $0xa0] sm:$0xff]
        %v243 = vld [vmem:[%s229 + $0xa8] sm:$0xff]
        %v244 = vld [vmem:[%s229 + $0xb0] sm:$0xff]
        %v245 = vld [vmem:[%s229 + $0xb8] sm:$0xff]
        %v246 = vld [vmem:[%s192] sm:$0xff]
        %v247 = vld [vmem:[%s192 + $0x8] sm:$0xff]
        %v248 = vld [vmem:[%s192 + $0x10] sm:$0xff]
        %v249 = vld [vmem:[%s192 + $0x18] sm:$0xff]
        %v250 = vld [vmem:[%s192 + $0x20] sm:$0xff]
        %v251 = vld [vmem:[%s192 + $0x28] sm:$0xff]
        %v252 = vld [vmem:[%s192 + $0x30] sm:$0xff]
        %v253 = vld [vmem:[%s192 + $0x38] sm:$0xff]
        %v254 = vld [vmem:[%s192 + $0x40] sm:$0xff]
        %v255 = vld [vmem:[%s192 + $0x48] sm:$0xff]
        %v256 = vld [vmem:[%s192 + $0x50] sm:$0xff]
        %v257 = vld [vmem:[%s192 + $0x58] sm:$0xff]
        %v258 = vld [vmem:[%s192 + $0x60] sm:$0xff]
        %v259 = vld [vmem:[%s192 + $0x68] sm:$0xff]
        %v260 = vld [vmem:[%s192 + $0x70] sm:$0xff]
        %v261 = vld [vmem:[%s192 + $0x78] sm:$0xff]
        %v262 = vld [vmem:[%s192 + $0x80] sm:$0xff]
        %v263 = vld [vmem:[%s192 + $0x88] sm:$0xff]
        %v264 = vld [vmem:[%s192 + $0x90] sm:$0xff]
        %v265 = vld [vmem:[%s192 + $0x98] sm:$0xff]
        %v266 = vld [vmem:[%s192 + $0xa0] sm:$0xff]
        %v267 = vld [vmem:[%s192 + $0xa8] sm:$0xff]
        %v268 = vld [vmem:[%s192 + $0xb0] sm:$0xff]
        %v269 = vld [vmem:[%s192 + $0xb8] sm:$0xff]
        %v270 = vld [vmem:[%s192 + $0xc0] sm:$0xff]
        %v271 = vld [vmem:[%s192 + $0xc8] sm:$0xff]
        %v272 = vld [vmem:[%s192 + $0xd0] sm:$0xff]
        %v273 = vld [vmem:[%s192 + $0xd8] sm:$0xff]
        %v274 = vld [vmem:[%s192 + $0xe0] sm:$0xff]
        %v275 = vld [vmem:[%s192 + $0xe8] sm:$0xff]
        %v276 = vld [vmem:[%s192 + $0xf0] sm:$0xff]
        %v277 = vld [vmem:[%s192 + $0xf8] sm:$0xff]
        %v278 = vld [vmem:[%s192 + $0x100] sm:$0xff]
        %v279 = vld [vmem:[%s192 + $0x108] sm:$0xff]
        %v280 = vld [vmem:[%s192 + $0x110] sm:$0xff]
        %v281 = vld [vmem:[%s192 + $0x118] sm:$0xff]
        %v282 = vld [vmem:[%s192 + $0x120] sm:$0xff]
        %v283 = vld [vmem:[%s192 + $0x128] sm:$0xff]
        %v284 = vld [vmem:[%s192 + $0x130] sm:$0xff]
        %v285 = vld [vmem:[%s192 + $0x138] sm:$0xff]
        %v286 = vld [vmem:[%s192 + $0x140] sm:$0xff]
        %v287 = vld [vmem:[%s192 + $0x148] sm:$0xff]
        %v288 = vld [vmem:[%s192 + $0x150] sm:$0xff]
        %v289 = vld [vmem:[%s192 + $0x158] sm:$0xff]
        %v290 = vld [vmem:[%s192 + $0x160] sm:$0xff]
        %v291 = vld [vmem:[%s192 + $0x168] sm:$0xff]
        %v292 = vld [vmem:[%s192 + $0x170] sm:$0xff]
        %v293 = vld [vmem:[%s192 + $0x178] sm:$0xff]
        %v294 = vld [vmem:[%s192 + $0x180] sm:$0xff]
        %v295 = vld [vmem:[%s192 + $0x188] sm:$0xff]
        %v296 = vld [vmem:[%s192 + $0x190] sm:$0xff]
        %v297 = vld [vmem:[%s192 + $0x198] sm:$0xff]
        %v298 = vld [vmem:[%s192 + $0x1a0] sm:$0xff]
        %v299 = vld [vmem:[%s192 + $0x1a8] sm:$0xff]
        %v300 = vld [vmem:[%s192 + $0x1b0] sm:$0xff]
        %v301 = vld [vmem:[%s192 + $0x1b8] sm:$0xff]
        %v302 = vld [vmem:[%s192 + $0x1c0] sm:$0xff]
        %v303 = vld [vmem:[%s192 + $0x1c8] sm:$0xff]
        %v304 = vld [vmem:[%s192 + $0x1d0] sm:$0xff]
        %v305 = vld [vmem:[%s192 + $0x1d8] sm:$0xff]
        %v306 = vld [vmem:[%s192 + $0x1e0] sm:$0xff]
        %v307 = vld [vmem:[%s192 + $0x1e8] sm:$0xff]
        %v308 = vld [vmem:[%s192 + $0x1f0] sm:$0xff]
        %v309 = vld [vmem:[%s192 + $0x1f8] sm:$0xff]
        %v310 = vld [vmem:[%s192 + $0x200] sm:$0xff]
        %v311 = vld [vmem:[%s192 + $0x208] sm:$0xff]
        %v312 = vld [vmem:[%s192 + $0x210] sm:$0xff]
        %v313 = vld [vmem:[%s192 + $0x218] sm:$0xff]
        %v314 = vld [vmem:[%s192 + $0x220] sm:$0xff]
        %v315 = vld [vmem:[%s192 + $0x228] sm:$0xff]
        %v316 = vld [vmem:[%s192 + $0x230] sm:$0xff]
        %v317 = vld [vmem:[%s192 + $0x238] sm:$0xff]
        %v318 = vld [vmem:[%s192 + $0x240] sm:$0xff]
        %v319 = vld [vmem:[%s192 + $0x248] sm:$0xff]
        %v320 = vld [vmem:[%s192 + $0x250] sm:$0xff]
        %v321 = vld [vmem:[%s192 + $0x258] sm:$0xff]
        %v322 = vld [vmem:[%s192 + $0x260] sm:$0xff]
        %v323 = vld [vmem:[%s192 + $0x268] sm:$0xff]
        %v324 = vld [vmem:[%s192 + $0x270] sm:$0xff]
        %v325 = vld [vmem:[%s192 + $0x278] sm:$0xff]
        %v326 = vld [vmem:[%s192 + $0x280] sm:$0xff]
        %v327 = vld [vmem:[%s192 + $0x288] sm:$0xff]
        %v328 = vld [vmem:[%s192 + $0x290] sm:$0xff]
        %v329 = vld [vmem:[%s192 + $0x298] sm:$0xff]
        %v330 = vld [vmem:[%s192 + $0x2a0] sm:$0xff]
        %v331 = vld [vmem:[%s192 + $0x2a8] sm:$0xff]
        %v332 = vld [vmem:[%s192 + $0x2b0] sm:$0xff]
        %v333 = vld [vmem:[%s192 + $0x2b8] sm:$0xff]
        %v334 = vld [vmem:[%s192 + $0x2c0] sm:$0xff]
        %v335 = vld [vmem:[%s192 + $0x2c8] sm:$0xff]
        %v336 = vld [vmem:[%s192 + $0x2d0] sm:$0xff]
        %v337 = vld [vmem:[%s192 + $0x2d8] sm:$0xff]
        %v338 = vld [vmem:[%s192 + $0x2e0] sm:$0xff]
        %v339 = vld [vmem:[%s192 + $0x2e8] sm:$0xff]
        %v340 = vld [vmem:[%s192 + $0x2f0] sm:$0xff]
        %v341 = vld [vmem:[%s192 + $0x2f8] sm:$0xff]
        %v342 = vld [vmem:[%s192 + $0x300] sm:$0xff]
        %v343 = vld [vmem:[%s192 + $0x308] sm:$0xff]
        %v344 = vld [vmem:[%s192 + $0x310] sm:$0xff]
        %v345 = vld [vmem:[%s192 + $0x318] sm:$0xff]
        %v346 = vld [vmem:[%s192 + $0x320] sm:$0xff]
        %v347 = vld [vmem:[%s192 + $0x328] sm:$0xff]
        %v348 = vld [vmem:[%s192 + $0x330] sm:$0xff]
        %v349 = vld [vmem:[%s192 + $0x338] sm:$0xff]
        %v350 = vld [vmem:[%s192 + $0x340] sm:$0xff]
        %v351 = vld [vmem:[%s192 + $0x348] sm:$0xff]
        %v352 = vld [vmem:[%s192 + $0x350] sm:$0xff]
        %v353 = vld [vmem:[%s192 + $0x358] sm:$0xff]
        %v354 = vld [vmem:[%s192 + $0x360] sm:$0xff]
        %v355 = vld [vmem:[%s192 + $0x368] sm:$0xff]
        %v356 = vld [vmem:[%s192 + $0x370] sm:$0xff]
        %v357 = vld [vmem:[%s192 + $0x378] sm:$0xff]
        %v358 = vld [vmem:[%s192 + $0x380] sm:$0xff]
        %v359 = vld [vmem:[%s192 + $0x388] sm:$0xff]
        %v360 = vld [vmem:[%s192 + $0x390] sm:$0xff]
        %v361 = vld [vmem:[%s192 + $0x398] sm:$0xff]
        %v362 = vld [vmem:[%s192 + $0x3a0] sm:$0xff]
        %v363 = vld [vmem:[%s192 + $0x3a8] sm:$0xff]
        %v364 = vld [vmem:[%s192 + $0x3b0] sm:$0xff]
        %v365 = vld [vmem:[%s192 + $0x3b8] sm:$0xff]
        %v366 = vld [vmem:[%s192 + $0x3c0] sm:$0xff]
        %v367 = vld [vmem:[%s192 + $0x3c8] sm:$0xff]
        %v368 = vld [vmem:[%s192 + $0x3d0] sm:$0xff]
        %v369 = vld [vmem:[%s192 + $0x3d8] sm:$0xff]
        %v370 = vld [vmem:[%s192 + $0x3e0] sm:$0xff]
        %v371 = vld [vmem:[%s192 + $0x3e8] sm:$0xff]
        %v372 = vld [vmem:[%s192 + $0x3f0] sm:$0xff]
        %v373 = vld [vmem:[%s192 + $0x3f8] sm:$0xff]
        %v374 = vld [vmem:[%s212] sm:$0xff]
        %v375 = vld [vmem:[%s212 + $0x8] sm:$0xff]
        %376 = vmatprep.subr.mxu0 0.0
        %377 = vmatpush1.msra.mxu0 %v246
        %378 = vmatprep.subr.mxu0 0.0
        %379 = vmatpush1.msra.mxu0 %v247
        %380 = vmatprep.subr.mxu0 0.0
        %381 = vmatpush1.msra.mxu0 %v248
        %382 = vmatprep.subr.mxu0 0.0
        %383 = vmatpush1.msra.mxu0 %v249
        %384 = vmatprep.subr.mxu0 0.0
        %385 = vmatpush1.msra.mxu0 %v250
        %386 = vmatprep.subr.mxu0 0.0
        %387 = vmatpush1.msra.mxu0 %v251
        %388 = vmatprep.subr.mxu0 0.0
        %389 = vmatpush1.msra.mxu0 %v252
        %390 = vmatprep.subr.mxu0 0.0
        %391 = vmatpush1.msra.mxu0 %v253
        %392 = vmatprep.subr.mxu0 0.0
        %393 = vmatpush1.msra.mxu0 %v254
        %394 = vmatprep.subr.mxu0 0.0
        %395 = vmatpush1.msra.mxu0 %v255
        %396 = vmatprep.subr.mxu0 0.0
        %397 = vmatpush1.msra.mxu0 %v256
        %398 = vmatprep.subr.mxu0 0.0
        %399 = vmatpush1.msra.mxu0 %v257
        %400 = vmatprep.subr.mxu0 0.0
        %401 = vmatpush1.msra.mxu0 %v258
        %402 = vmatprep.subr.mxu0 0.0
        %403 = vmatpush1.msra.mxu0 %v259
        %404 = vmatprep.subr.mxu0 0.0
        %405 = vmatpush1.msra.mxu0 %v260
        %406 = vmatprep.subr.mxu0 0.0
        %407 = vmatpush1.msra.mxu0 %v261
        %408 = vmatprep.subr.mxu0 0.0
        %409 = vmatpush1.msra.mxu0 %v262
        %410 = vmatprep.subr.mxu0 0.0
        %411 = vmatpush1.msra.mxu0 %v263
        %412 = vmatprep.subr.mxu0 0.0
        %413 = vmatpush1.msra.mxu0 %v264
        %414 = vmatprep.subr.mxu0 0.0
        %415 = vmatpush1.msra.mxu0 %v265
        %416 = vmatprep.subr.mxu0 0.0
        %417 = vmatpush1.msra.mxu0 %v266
        %418 = vmatprep.subr.mxu0 0.0
        %419 = vmatpush1.msra.mxu0 %v267
        %420 = vmatprep.subr.mxu0 0.0
        %421 = vmatpush1.msra.mxu0 %v268
        %422 = vmatprep.subr.mxu0 0.0
        %423 = vmatpush1.msra.mxu0 %v269
        %424 = vmatprep.subr.mxu0 0.0
        %425 = vmatpush1.msra.mxu0 %v270
        %426 = vmatprep.subr.mxu0 0.0
        %427 = vmatpush1.msra.mxu0 %v271
        %428 = vmatprep.subr.mxu0 0.0
        %429 = vmatpush1.msra.mxu0 %v272
        %430 = vmatprep.subr.mxu0 0.0
        %431 = vmatpush1.msra.mxu0 %v273
        %432 = vmatprep.subr.mxu0 0.0
        %433 = vmatpush1.msra.mxu0 %v274
        %434 = vmatprep.subr.mxu0 0.0
        %435 = vmatpush1.msra.mxu0 %v275
        %436 = vmatprep.subr.mxu0 0.0
        %437 = vmatpush1.msra.mxu0 %v276
        %438 = vmatprep.subr.mxu0 0.0
        %439 = vmatpush1.msra.mxu0 %v277
        %440 = vmatprep.mubr.f32.mxu0 %v231
        %441 = vmatmul.mubr.f32.gmra.mrb[0].mxu0 %v230
        %v442 = vpop.f32.mrb[0].mxu0
        %v443 = vadd.f32 0.0, %v442
        %v444 = vpop.f32.mrb[0].mxu0
        %445 = vmatprep.mubr.f32.mxu0 %v239
        %446 = vmatmul.mubr.f32.gmra.mrb[0].mxu0 %v238
        %v447 = vpop.f32.mrb[0].mxu0
        %v448 = vadd.f32 0.0, %v447
        %v449 = vpop.f32.mrb[0].mxu0
        %450 = vdwg.mxu0
        %451 = vmatprep.subr.mxu0 0.0
        %452 = vmatpush1.msra.mxu0 %v278
        %453 = vmatprep.subr.mxu0 0.0
        %454 = vmatpush1.msra.mxu0 %v279
        %455 = vmatprep.subr.mxu0 0.0
        %456 = vmatpush1.msra.mxu0 %v280
        %457 = vmatprep.subr.mxu0 0.0
        %458 = vmatpush1.msra.mxu0 %v281
        %459 = vmatprep.subr.mxu0 0.0
        %460 = vmatpush1.msra.mxu0 %v282
        %461 = vmatprep.subr.mxu0 0.0
        %462 = vmatpush1.msra.mxu0 %v283
        %463 = vmatprep.subr.mxu0 0.0
        %464 = vmatpush1.msra.mxu0 %v284
        %465 = vmatprep.subr.mxu0 0.0
        %466 = vmatpush1.msra.mxu0 %v285
        %467 = vmatprep.subr.mxu0 0.0
        %468 = vmatpush1.msra.mxu0 %v286
        %469 = vmatprep.subr.mxu0 0.0
        %470 = vmatpush1.msra.mxu0 %v287
        %471 = vmatprep.subr.mxu0 0.0
        %472 = vmatpush1.msra.mxu0 %v288
        %473 = vmatprep.subr.mxu0 0.0
        %474 = vmatpush1.msra.mxu0 %v289
        %475 = vmatprep.subr.mxu0 0.0
        %476 = vmatpush1.msra.mxu0 %v290
        %477 = vmatprep.subr.mxu0 0.0
        %478 = vmatpush1.msra.mxu0 %v291
        %479 = vmatprep.subr.mxu0 0.0
        %480 = vmatpush1.msra.mxu0 %v292
        %481 = vmatprep.subr.mxu0 0.0
        %482 = vmatpush1.msra.mxu0 %v293
        %483 = vmatprep.subr.mxu0 0.0
        %484 = vmatpush1.msra.mxu0 %v294
        %485 = vmatprep.subr.mxu0 0.0
        %486 = vmatpush1.msra.mxu0 %v295
        %487 = vmatprep.subr.mxu0 0.0
        %488 = vmatpush1.msra.mxu0 %v296
        %489 = vmatprep.subr.mxu0 0.0
        %490 = vmatpush1.msra.mxu0 %v297
        %491 = vmatprep.subr.mxu0 0.0
        %492 = vmatpush1.msra.mxu0 %v298
        %493 = vmatprep.subr.mxu0 0.0
        %494 = vmatpush1.msra.mxu0 %v299
        %495 = vmatprep.subr.mxu0 0.0
        %496 = vmatpush1.msra.mxu0 %v300
        %497 = vmatprep.subr.mxu0 0.0
        %498 = vmatpush1.msra.mxu0 %v301
        %499 = vmatprep.subr.mxu0 0.0
        %500 = vmatpush1.msra.mxu0 %v302
        %501 = vmatprep.subr.mxu0 0.0
        %502 = vmatpush1.msra.mxu0 %v303
        %503 = vmatprep.subr.mxu0 0.0
        %504 = vmatpush1.msra.mxu0 %v304
        %505 = vmatprep.subr.mxu0 0.0
        %506 = vmatpush1.msra.mxu0 %v305
        %507 = vmatprep.subr.mxu0 0.0
        %508 = vmatpush1.msra.mxu0 %v306
        %509 = vmatprep.subr.mxu0 0.0
        %510 = vmatpush1.msra.mxu0 %v307
        %511 = vmatprep.subr.mxu0 0.0
        %512 = vmatpush1.msra.mxu0 %v308
        %513 = vmatprep.subr.mxu0 0.0
        %514 = vmatpush1.msra.mxu0 %v309
        %515 = vmatprep.mubr.f32.mxu0 %v233
        %516 = vmatmul.mubr.f32.gmra.mrb[0].mxu0 %v232
        %v517 = vpop.f32.mrb[0].mxu0
        %v518 = vadd.f32 %v443, %v517
        %v519 = vpop.f32.mrb[0].mxu0
        %520 = vmatprep.mubr.f32.mxu0 %v241
        %521 = vmatmul.mubr.f32.gmra.mrb[0].mxu0 %v240
        %v522 = vpop.f32.mrb[0].mxu0
        %v523 = vadd.f32 %v448, %v522
        %v524 = vpop.f32.mrb[0].mxu0
        %525 = vdwg.mxu0
        %526 = vmatprep.subr.mxu0 0.0
        %527 = vmatpush1.msra.mxu0 %v310
        %528 = vmatprep.subr.mxu0 0.0
        %529 = vmatpush1.msra.mxu0 %v311
        %530 = vmatprep.subr.mxu0 0.0
        %531 = vmatpush1.msra.mxu0 %v312
        %532 = vmatprep.subr.mxu0 0.0
        %533 = vmatpush1.msra.mxu0 %v313
        %534 = vmatprep.subr.mxu0 0.0
        %535 = vmatpush1.msra.mxu0 %v314
        %536 = vmatprep.subr.mxu0 0.0
        %537 = vmatpush1.msra.mxu0 %v315
        %538 = vmatprep.subr.mxu0 0.0
        %539 = vmatpush1.msra.mxu0 %v316
        %540 = vmatprep.subr.mxu0 0.0
        %541 = vmatpush1.msra.mxu0 %v317
        %542 = vmatprep.subr.mxu0 0.0
        %543 = vmatpush1.msra.mxu0 %v318
        %544 = vmatprep.subr.mxu0 0.0
        %545 = vmatpush1.msra.mxu0 %v319
        %546 = vmatprep.subr.mxu0 0.0
        %547 = vmatpush1.msra.mxu0 %v320
        %548 = vmatprep.subr.mxu0 0.0
        %549 = vmatpush1.msra.mxu0 %v321
        %550 = vmatprep.subr.mxu0 0.0
        %551 = vmatpush1.msra.mxu0 %v322
        %552 = vmatprep.subr.mxu0 0.0
        %553 = vmatpush1.msra.mxu0 %v323
        %554 = vmatprep.subr.mxu0 0.0
        %555 = vmatpush1.msra.mxu0 %v324
        %556 = vmatprep.subr.mxu0 0.0
        %557 = vmatpush1.msra.mxu0 %v325
        %558 = vmatprep.subr.mxu0 0.0
        %559 = vmatpush1.msra.mxu0 %v326
        %560 = vmatprep.subr.mxu0 0.0
        %561 = vmatpush1.msra.mxu0 %v327
        %562 = vmatprep.subr.mxu0 0.0
        %563 = vmatpush1.msra.mxu0 %v328
        %564 = vmatprep.subr.mxu0 0.0
        %565 = vmatpush1.msra.mxu0 %v329
        %566 = vmatprep.subr.mxu0 0.0
        %567 = vmatpush1.msra.mxu0 %v330
        %568 = vmatprep.subr.mxu0 0.0
        %569 = vmatpush1.msra.mxu0 %v331
        %570 = vmatprep.subr.mxu0 0.0
        %571 = vmatpush1.msra.mxu0 %v332
        %572 = vmatprep.subr.mxu0 0.0
        %573 = vmatpush1.msra.mxu0 %v333
        %574 = vmatprep.subr.mxu0 0.0
        %575 = vmatpush1.msra.mxu0 %v334
        %576 = vmatprep.subr.mxu0 0.0
        %577 = vmatpush1.msra.mxu0 %v335
        %578 = vmatprep.subr.mxu0 0.0
        %579 = vmatpush1.msra.mxu0 %v336
        %580 = vmatprep.subr.mxu0 0.0
        %581 = vmatpush1.msra.mxu0 %v337
        %582 = vmatprep.subr.mxu0 0.0
        %583 = vmatpush1.msra.mxu0 %v338
        %584 = vmatprep.subr.mxu0 0.0
        %585 = vmatpush1.msra.mxu0 %v339
        %586 = vmatprep.subr.mxu0 0.0
        %587 = vmatpush1.msra.mxu0 %v340
        %588 = vmatprep.subr.mxu0 0.0
        %589 = vmatpush1.msra.mxu0 %v341
        %590 = vmatprep.mubr.f32.mxu0 %v235
        %591 = vmatmul.mubr.f32.gmra.mrb[0].mxu0 %v234
        %v592 = vpop.f32.mrb[0].mxu0
        %v593 = vadd.f32 %v518, %v592
        %v594 = vpop.f32.mrb[0].mxu0
        %595 = vmatprep.mubr.f32.mxu0 %v243
        %596 = vmatmul.mubr.f32.gmra.mrb[0].mxu0 %v242
        %v597 = vpop.f32.mrb[0].mxu0
        %v598 = vadd.f32 %v523, %v597
        %v599 = vpop.f32.mrb[0].mxu0
        %600 = vdwg.mxu0
        %601 = vmatprep.subr.mxu0 0.0
        %602 = vmatpush1.msra.mxu0 %v342
        %603 = vmatprep.subr.mxu0 0.0
        %604 = vmatpush1.msra.mxu0 %v343
        %605 = vmatprep.subr.mxu0 0.0
        %606 = vmatpush1.msra.mxu0 %v344
        %607 = vmatprep.subr.mxu0 0.0
        %608 = vmatpush1.msra.mxu0 %v345
        %609 = vmatprep.subr.mxu0 0.0
        %610 = vmatpush1.msra.mxu0 %v346
        %611 = vmatprep.subr.mxu0 0.0
        %612 = vmatpush1.msra.mxu0 %v347
        %613 = vmatprep.subr.mxu0 0.0
        %614 = vmatpush1.msra.mxu0 %v348
        %615 = vmatprep.subr.mxu0 0.0
        %616 = vmatpush1.msra.mxu0 %v349
        %617 = vmatprep.subr.mxu0 0.0
        %618 = vmatpush1.msra.mxu0 %v350
        %619 = vmatprep.subr.mxu0 0.0
        %620 = vmatpush1.msra.mxu0 %v351
        %621 = vmatprep.subr.mxu0 0.0
        %622 = vmatpush1.msra.mxu0 %v352
        %623 = vmatprep.subr.mxu0 0.0
        %624 = vmatpush1.msra.mxu0 %v353
        %625 = vmatprep.subr.mxu0 0.0
        %626 = vmatpush1.msra.mxu0 %v354
        %627 = vmatprep.subr.mxu0 0.0
        %628 = vmatpush1.msra.mxu0 %v355
        %629 = vmatprep.subr.mxu0 0.0
        %630 = vmatpush1.msra.mxu0 %v356
        %631 = vmatprep.subr.mxu0 0.0
        %632 = vmatpush1.msra.mxu0 %v357
        %633 = vmatprep.subr.mxu0 0.0
        %634 = vmatpush1.msra.mxu0 %v358
        %635 = vmatprep.subr.mxu0 0.0
        %636 = vmatpush1.msra.mxu0 %v359
        %637 = vmatprep.subr.mxu0 0.0
        %638 = vmatpush1.msra.mxu0 %v360
        %639 = vmatprep.subr.mxu0 0.0
        %640 = vmatpush1.msra.mxu0 %v361
        %641 = vmatprep.subr.mxu0 0.0
        %642 = vmatpush1.msra.mxu0 %v362
        %643 = vmatprep.subr.mxu0 0.0
        %644 = vmatpush1.msra.mxu0 %v363
        %645 = vmatprep.subr.mxu0 0.0
        %646 = vmatpush1.msra.mxu0 %v364
        %647 = vmatprep.subr.mxu0 0.0
        %648 = vmatpush1.msra.mxu0 %v365
        %649 = vmatprep.subr.mxu0 0.0
        %650 = vmatpush1.msra.mxu0 %v366
        %651 = vmatprep.subr.mxu0 0.0
        %652 = vmatpush1.msra.mxu0 %v367
        %653 = vmatprep.subr.mxu0 0.0
        %654 = vmatpush1.msra.mxu0 %v368
        %655 = vmatprep.subr.mxu0 0.0
        %656 = vmatpush1.msra.mxu0 %v369
        %657 = vmatprep.subr.mxu0 0.0
        %658 = vmatpush1.msra.mxu0 %v370
        %659 = vmatprep.subr.mxu0 0.0
        %660 = vmatpush1.msra.mxu0 %v371
        %661 = vmatprep.subr.mxu0 0.0
        %662 = vmatpush1.msra.mxu0 %v372
        %663 = vmatprep.subr.mxu0 0.0
        %664 = vmatpush1.msra.mxu0 %v373
        %665 = vmatprep.mubr.f32.mxu0 %v237
        %666 = vmatmul.mubr.f32.gmra.mrb[0].mxu0 %v236
        %v667 = vpop.f32.mrb[0].mxu0
        %v668 = vadd.f32 %v593, %v667
        %v669 = vpop.f32.mrb[0].mxu0
        %670 = vmatprep.mubr.f32.mxu0 %v245
        %671 = vmatmul.mubr.f32.gmra.mrb[0].mxu0 %v244
        %v672 = vpop.f32.mrb[0].mxu0
        %v673 = vadd.f32 %v598, %v672
        %v674 = vpop.f32.mrb[0].mxu0
        %675 = vdwg.mxu0
        %v676 = vadd.f32 %v374, %v668
        %v677 = vadd.f32 %v375, %v673
        %678 = vst [vmem:[%s212] sm:$0xff] %v676
        %679 = vst [vmem:[%s212 + $0x8] sm:$0xff] %v677
        %s680 = sand.u32 %s105, 1
        %s681 = scalar_lea.sflag [#allocation6], %s680
        %s682 = sand.u32 %s105, 1
        %s683 = smul.addr %s682, 16
        %s684 = scalar_lea.vmem [#allocation9], %s683
        // Predicated region
        $region41: #{tpu_custom_call.1} parent=27 // pred_check
          %p685 = pneg %p115
        $region42: #{tpu_custom_call.1} parent=27 // pred_check_branch
          %687 = sbr.rel (%p685) target = $region44
        $region43: #{tpu_custom_call.1} parent=27 // pred_region
          %s688 = smul.u32 2, %s27
          %s690 = ssub.s32 256, 256
          %691 = vsyncadd %s681, %s690
          %s692 = smul.addr %s688, 2
          %s693 = sadd.s32 %s28, %s692
          %s694 = smul.addr %s693, 128
          %s695 = scalar_lea.hbm %s3, %s694
          %s696 = sshll.u32 %s684, 4
          %s697 = int_to_ptr.vmem [resolvable:$true] %s696
          %702 = dma.vmem_to_hbm [thread:$0]  %s697, 256, %s695, %s681, 128, 256, 8
        $region44: #{tpu_custom_call.1} parent=27 // pred_fallthru
          _
      $region28: #{tpu_custom_call.1} parent=5 // pred_fallthru
        _
      %p703 = scmp.le.s32.totalorder 2, %s17
      // Predicated region
      $region45: #{tpu_custom_call.1} parent=5 // pred_check
        %p704 = pneg %p703
      $region46: #{tpu_custom_call.1} parent=5 // pred_check_branch
        %706 = sbr.rel (%p704) target = $region48
      $region47: #{tpu_custom_call.1} parent=5 // pred_region
        %s707 = ssub.s32 %s17, 2
        // Predicated region
        $region49: #{tpu_custom_call.1} parent=47 // pred_check
          %p708 = pneg %p121
        $region50: #{tpu_custom_call.1} parent=47 // pred_check_branch
          %710 = sbr.rel (%p708) target = $region52
        $region51: #{tpu_custom_call.1} parent=47 // pred_region
          %s711 = sand.u32 %s106, 1
          %s712 = scalar_lea.sflag [#allocation6], %s711
          %s713 = sand.u32 %s106, 1
          %s714 = smul.addr %s713, 16
          %s715 = scalar_lea.vmem [#allocation9], %s714
          %716 = dma.done %s712, 256
        $region52: #{tpu_custom_call.1} parent=47 // pred_fallthru
          _
      $region48: #{tpu_custom_call.1} parent=5 // pred_fallthru
        _
    $region6: #{tpu_custom_call.1} parent=1 // loop_footer
      %s21 = sadd.s32 1, %s17
    $region7: #{tpu_custom_call.1} parent=1 // loop_footer_branch
      %16 = sbr.rel target = $region3
    $region8: #{tpu_custom_call.1} parent=1 // loop_exit
      _
    %717 = vsyncpa [#allocation5], 1
    %s718 = scalar_lea.sflag [#allocation5], 1
    %719 = vsyncpa %s718, 1
    %720 = vsyncpa [#allocation8], 1
    %s721 = scalar_lea.sflag [#allocation8], 1
    %722 = vsyncpa %s721, 1
    %723 = vsyncpa [#allocation6], 1
    %s724 = scalar_lea.sflag [#allocation6], 1
    %725 = vsyncpa %s724, 1

</llo_original>
